<compile_context>
chip_gen: v5e
topology: v5e:2x2
jax: 0.10.0
libtpu: 0.0.40
codegen_flags: <defaults>
</compile_context>

<pallas_src>
import jax
import jax.numpy as jnp
from jax import lax
from jax.experimental import pallas as pl
from jax.experimental.pallas import tpu as pltpu

LANES = 128        # lane tile (last dim)
SUBLANES = 8       # f32 sublane tile
MAX_TILE_R = 8192  # rows per grid step: 8192*128*4B = 4 MiB per f32 input block
CHUNK_R = 256      # in-kernel partial-reduction chunk (rows)


def _sublane_multiple(*dtypes):
    """Second-minor tile multiple for the given dtypes (8 f32 / 16 bf16 / 32 int8)."""
    m = SUBLANES
    for dt in dtypes:
        bits = jnp.dtype(dt).itemsize * 8
        m = max(m, SUBLANES * max(1, 32 // bits))
    return m


def _vmem_capacity_bytes():
    try:
        cap = int(pltpu.get_tpu_info().vmem_capacity_bytes)
        if cap > 0:
            return cap
    except Exception:
        pass
    return 64 << 20  # conservative default (v7x per-TensorCore VMEM)


def _num_tensorcores():
    """Best-effort TensorCore-per-chip count (1 on v5e/v6e, 2 on v7x)."""
    try:
        info = pltpu.get_tpu_info()
        for attr in ("num_tensorcores", "tensorcore_count"):
            v = getattr(info, attr, None)
            if isinstance(v, int) and 1 <= v <= 8:
                return v
    except Exception:
        pass
    try:
        kind = jax.devices()[0].device_kind.lower()
        if "v7" in kind or "tpu7" in kind or "7x" in kind:
            return 2
    except Exception:
        pass
    return 1


def _make_dice_kernel(rows_valid, tile_r, chunk, tiles_per_slice, needs_mask):
    """Kernel with (1, 8, 128) f32 accumulator output blocks resident across
    the inner ("arbitrary") grid axis. The per-tile reduction streams the
    (tile_r, 128) block in `chunk`-row pieces so elementwise temporaries stay
    in vregs."""
    num_chunks = tile_r // chunk

    def _accumulate(p_ref, t_ref, pt_out_ref, s_out_ref, row0, masked):
        def body(k, carry):
            acc_pt, acc_s = carry
            r0 = k * chunk
            if not isinstance(r0, int):
                r0 = pl.multiple_of(r0, chunk)
            pc = p_ref[pl.ds(r0, chunk), :].astype(jnp.float32)
            tc = t_ref[pl.ds(r0, chunk), :].astype(jnp.float32)
            if masked:
                # Zero rows past the end of the array (partial edge tile or a
                # clamped duplicate block on the last slice).
                row_ids = row0 + r0 + lax.broadcasted_iota(jnp.int32, (chunk, 1), 0)
                valid = row_ids < rows_valid
                pc = jnp.where(valid, pc, 0.0)
                tc = jnp.where(valid, tc, 0.0)
            # (chunk,128) -> (8,128): leading-axis split reshape, pure VPU adds.
            acc_pt = acc_pt + (pc * tc).reshape(
                chunk // SUBLANES, SUBLANES, LANES).sum(axis=0)
            acc_s = acc_s + (pc + tc).reshape(
                chunk // SUBLANES, SUBLANES, LANES).sum(axis=0)
            return acc_pt, acc_s

        zero = jnp.zeros((SUBLANES, LANES), jnp.float32)
        if num_chunks == 1:
            acc_pt, acc_s = body(0, (zero, zero))
        else:
            acc_pt, acc_s = lax.fori_loop(0, num_chunks, body, (zero, zero))
        pt_out_ref[...] += acc_pt[None]
        s_out_ref[...] += acc_s[None]

    def kernel(p_ref, t_ref, pt_out_ref, s_out_ref):
        c = pl.program_id(0)   # core slice (parallel)
        i = pl.program_id(1)   # row-tile within slice (arbitrary / reduction)

        @pl.when(i == 0)
        def _():
            pt_out_ref[...] = jnp.zeros_like(pt_out_ref)
            s_out_ref[...] = jnp.zeros_like(s_out_ref)

        row0 = (c * tiles_per_slice + i) * tile_r

        if needs_mask:
            overhang = row0 + tile_r > rows_valid

            @pl.when(jnp.logical_not(overhang))
            def _():
                _accumulate(p_ref, t_ref, pt_out_ref, s_out_ref, row0, masked=False)

            @pl.when(overhang)
            def _():
                _accumulate(p_ref, t_ref, pt_out_ref, s_out_ref, row0, masked=True)
        else:
            _accumulate(p_ref, t_ref, pt_out_ref, s_out_ref, row0, masked=False)

    return kernel


def dice_loss(preds, targets, reduction="micro", *, max_tile_r=MAX_TILE_R):
    """Pallas implementation of DiceLoss.forward (micro averaging)."""
    assert reduction == "micro", "only 'micro' reduction implemented"
    # TODO(synk): torchmetrics' `dice` also supports int-label targets (argmax
    # over C / ignore_index); here targets are expected already one-hot.

    p_flat = preds.reshape(-1)
    t_flat = targets.reshape(-1)
    n = p_flat.shape[0]
    if n == 0:
        # denom == 0 -> dice defined as 0 -> loss = 1 (matches reference).
        return jnp.float32(1.0)

    rows = n // LANES
    n_main = rows * LANES

    # Ragged tail (< 128 elements): reduce directly in the wrapper instead of
    # padding/copying the whole array through HBM.
    tail_inter = jnp.float32(0.0)
    tail_sum = jnp.float32(0.0)
    if n_main < n:
        p_tail = p_flat[n_main:].astype(jnp.float32)
        t_tail = t_flat[n_main:].astype(jnp.float32)
        tail_inter = jnp.sum(p_tail * t_tail)
        tail_sum = jnp.sum(p_tail) + jnp.sum(t_tail)

    if rows == 0:
        inter = tail_inter
        denom = tail_sum
    else:
        if n_main < n:
            p_flat = p_flat[:n_main]
            t_flat = t_flat[:n_main]
        p2 = p_flat.reshape(rows, LANES)   # row-major reshape, lane-dense
        t2 = t_flat.reshape(rows, LANES)

        sub_mult = _sublane_multiple(p2.dtype, t2.dtype)
        bytes_per_row = LANES * (p2.dtype.itemsize + t2.dtype.itemsize)

        # Tile sizing: as large as possible (amortize ~0.35us/step pipeline
        # cost) while 2 pipeline buffers of both inputs stay within ~1/3 of
        # the generation's VMEM (64 MiB per TC on v7x, 128 MiB on v5e/v6e).
        vmem_cap = _vmem_capacity_bytes()
        hw_cap_rows = ((vmem_cap // 3) // (2 * bytes_per_row)) // sub_mult * sub_mult
        hw_cap_rows = max(sub_mult, hw_cap_rows)
        rows_rounded = ((rows + sub_mult - 1) // sub_mult) * sub_mult
        tile_r = min(int(max_tile_r), hw_cap_rows, rows_rounded)
        tile_r = max(sub_mult, (tile_r // sub_mult) * sub_mult)

        # In-kernel reduction chunk: keeps p*t / p+t temporaries vreg-sized.
        chunk = tile_r
        if tile_r > 2 * CHUNK_R:
            for cand in (CHUNK_R, 2 * CHUNK_R, CHUNK_R // 2):
                if cand >= sub_mult and tile_r % cand == 0:
                    chunk = cand
                    break

        num_tiles = pl.cdiv(rows, tile_r)
        num_slices = max(1, min(_num_tensorcores(), num_tiles))
        tiles_per_slice = pl.cdiv(num_tiles, num_slices)

        # Masking only needed if the last tile is partial or a slice owns a
        # logical tile index past the end (decided at trace time).
        needs_mask = (rows % tile_r != 0) or (num_tiles != num_slices * tiles_per_slice)

        def in_index_map(c, i):
            # Clamp so no DMA targets a block entirely past the array; such
            # blocks re-read valid data and are zeroed by the in-kernel mask.
            return (jnp.minimum(c * tiles_per_slice + i, num_tiles - 1), 0)

        kernel = _make_dice_kernel(rows, tile_r, chunk, tiles_per_slice, needs_mask)

        # Explicit VMEM budget: double-buffered input blocks + headroom for
        # outputs/temporaries; never exceeds v7x's 64 MiB physical VMEM.
        vmem_limit = 2 * tile_r * bytes_per_row + (16 << 20)
        vmem_limit = int(max(32 << 20, min(vmem_limit, 60 << 20)))

        out_pt, out_s = pl.pallas_call(
            kernel,
            out_shape=(
                jax.ShapeDtypeStruct((num_slices, SUBLANES, LANES), jnp.float32),
                jax.ShapeDtypeStruct((num_slices, SUBLANES, LANES), jnp.float32),
            ),
            grid_spec=pltpu.PrefetchScalarGridSpec(
                num_scalar_prefetch=0,
                grid=(num_slices, tiles_per_slice),
                in_specs=[
                    pl.BlockSpec((tile_r, LANES), in_index_map),
                    pl.BlockSpec((tile_r, LANES), in_index_map),
                ],
                out_specs=[
                    pl.BlockSpec((1, SUBLANES, LANES), lambda c, i: (c, 0, 0)),
                    pl.BlockSpec((1, SUBLANES, LANES), lambda c, i: (c, 0, 0)),
                ],
            ),
            compiler_params=pltpu.CompilerParams(
                dimension_semantics=("parallel", "arbitrary"),
                vmem_limit_bytes=vmem_limit,
            ),
        )(p2, t2)

        inter = jnp.sum(out_pt) + tail_inter
        denom = jnp.sum(out_s) + tail_sum

    dice = jnp.where(denom > 0.0, 2.0 * inter / denom, jnp.float32(0.0))
    return jnp.float32(1.0) - dice


def _dice_loss_ref(preds, targets):
    p = preds.astype(jnp.float32)
    t = targets.astype(jnp.float32)
    inter = jnp.sum(p * t)
    denom = jnp.sum(p) + jnp.sum(t)
    dice = jnp.where(denom > 0.0, 2.0 * inter / denom, 0.0)
    return 1.0 - dice


def _make_inputs(key, shape, dtype=jnp.float32):
    n_, c_, h_, w_ = shape
    k1, k2 = jax.random.split(key)
    logits = jax.random.normal(k1, shape, dtype=jnp.float32)
    preds = jax.nn.softmax(logits, axis=1).astype(dtype)
    labels = jax.random.randint(k2, (n_, h_, w_), 0, c_)
    targets = jnp.transpose(
        jax.nn.one_hot(labels, c_, dtype=jnp.float32), (0, 3, 1, 2)
    ).astype(dtype)
    return preds, targets


if __name__ == "__main__":
    key = jax.random.PRNGKey(0)
    keys = jax.random.split(key, 6)

    # 1) Basic NCHW softmax probs vs. one-hot targets (single tile).
    preds, targets = _make_inputs(keys[0], (2, 4, 16, 16))
    loss = jax.block_until_ready(dice_loss(preds, targets))
    ref = _dice_loss_ref(preds, targets)
    assert jnp.allclose(loss, ref, atol=1e-5, rtol=1e-5), (loss, ref)

    # 2) Multi-tile accumulation + partial edge tile (forced small tile).
    preds2, targets2 = _make_inputs(keys[1], (2, 4, 20, 20))  # 3200 -> 25 rows
    loss2 = jax.block_until_ready(dice_loss(preds2, targets2, max_tile_r=8))
    ref2 = _dice_loss_ref(preds2, targets2)
    assert jnp.allclose(loss2, ref2, atol=1e-5, rtol=1e-5), (loss2, ref2)

    # 3) Chunked in-kernel reduction (tile_r > chunk), single tile.
    preds3, targets3 = _make_inputs(keys[2], (2, 4, 128, 128))  # 1024 rows
    loss3 = jax.block_until_ready(dice_loss(preds3, targets3))
    ref3 = _dice_loss_ref(preds3, targets3)
    assert jnp.allclose(loss3, ref3, atol=1e-5, rtol=1e-5), (loss3, ref3)

    # 4) Multi-tile + masked overhanging tile + chunked reduction.
    loss4 = jax.block_until_ready(dice_loss(preds3, targets3, max_tile_r=768))
    assert jnp.allclose(loss4, ref3, atol=1e-5, rtol=1e-5), (loss4, ref3)

    # 5) bf16 inputs (native-dtype DMA, 16-row sublane multiple).
    preds5, targets5 = _make_inputs(keys[3], (2, 4, 16, 16), dtype=jnp.bfloat16)
    loss5 = jax.block_until_ready(dice_loss(preds5, targets5))
    ref5 = _dice_loss_ref(preds5, targets5)
    assert jnp.allclose(loss5, ref5, atol=1e-4, rtol=1e-4), (loss5, ref5)

    # 6) Ragged element count (n % 128 != 0): tail reduced in the wrapper.
    preds6, targets6 = _make_inputs(keys[4], (1, 3, 5, 139))  # 2085 elements
    loss6 = jax.block_until_ready(dice_loss(preds6, targets6))
    ref6 = _dice_loss_ref(preds6, targets6)
    assert jnp.allclose(loss6, ref6, atol=1e-5, rtol=1e-5), (loss6, ref6)

    print("KERNEL_OK")
</pallas_src>

<mosaic_0001>
module attributes {stable_mosaic.version = 11 : i64} {
  func.func @kernel(%arg0: i32, %arg1: i32, %arg2: memref<16x128xf32, #tpu.memory_space<vmem>>, %arg3: memref<16x128xf32, #tpu.memory_space<vmem>>, %arg4: memref<1x8x128xf32, #tpu.memory_space<vmem>>, %arg5: memref<1x8x128xf32, #tpu.memory_space<vmem>>) attributes {dimension_semantics = [#tpu.dimension_semantics<parallel>, #tpu.dimension_semantics<arbitrary>], iteration_bounds = array<i64: 1, 1>, scalar_prefetch = 0 : i64, scratch_operands = 0 : i64, tpu.core_type = #tpu.core_type<tc>, window_params = [{transform_indices = @transform_0, window_bounds = array<i64: 16, 128>}, {transform_indices = @transform_1, window_bounds = array<i64: 16, 128>}, {transform_indices = @transform_2, window_bounds = array<i64: 1, 8, 128>}, {transform_indices = @transform_3, window_bounds = array<i64: 1, 8, 128>}]} {
    %c0_i32 = arith.constant 0 : i32
    %0 = arith.cmpi eq, %arg1, %c0_i32 : i32
    %1 = arith.extui %0 : i1 to i32
    %c0_i32_0 = arith.constant 0 : i32
    %2 = arith.cmpi ne, %1, %c0_i32_0 : i32
    scf.if %2 {
      %cst_18 = arith.constant 0.000000e+00 : f32
      %22 = vector.broadcast %cst_18 : f32 to vector<1x8x128xf32>
      %c0_19 = arith.constant 0 : index
      %c0_20 = arith.constant 0 : index
      %c0_21 = arith.constant 0 : index
      %23 = vector.load %arg4[%c0_19, %c0_20, %c0_21] : memref<1x8x128xf32, #tpu.memory_space<vmem>>, vector<1x8x128xf32>
      tpu.vector_store %arg4[%c0_19, %c0_20, %c0_21], %22 {strides = array<i32>} : memref<1x8x128xf32, #tpu.memory_space<vmem>>, vector<1x8x128xf32>,
      %cst_22 = arith.constant 0.000000e+00 : f32
      %24 = vector.broadcast %cst_22 : f32 to vector<1x8x128xf32>
      %c0_23 = arith.constant 0 : index
      %c0_24 = arith.constant 0 : index
      %c0_25 = arith.constant 0 : index
      %25 = vector.load %arg5[%c0_23, %c0_24, %c0_25] : memref<1x8x128xf32, #tpu.memory_space<vmem>>, vector<1x8x128xf32>
      tpu.vector_store %arg5[%c0_23, %c0_24, %c0_25], %24 {strides = array<i32>} : memref<1x8x128xf32, #tpu.memory_space<vmem>>, vector<1x8x128xf32>,
    } else {
    }
    %cst = arith.constant 0.000000e+00 : f32
    %3 = vector.broadcast %cst : f32 to vector<8x128xf32>
    %c0 = arith.constant 0 : index
    %c0_1 = arith.constant 0 : index
    %4 = vector.load %arg2[%c0, %c0_1] : memref<16x128xf32, #tpu.memory_space<vmem>>, vector<16x128xf32>
    %c0_2 = arith.constant 0 : index
    %c0_3 = arith.constant 0 : index
    %5 = vector.load %arg3[%c0_2, %c0_3] : memref<16x128xf32, #tpu.memory_space<vmem>>, vector<16x128xf32>
    %6 = arith.mulf %4, %5 : vector<16x128xf32>
    %7 = vector.shape_cast %6 : vector<16x128xf32> to vector<2x8x128xf32>
    %cst_4 = arith.constant dense<0.000000e+00> : vector<8x128xf32>
    %8 = vector.multi_reduction <add>, %7, %cst_4 [0] : vector<2x8x128xf32> to vector<8x128xf32>
    %9 = arith.addf %3, %8 : vector<8x128xf32>
    %10 = arith.addf %4, %5 : vector<16x128xf32>
    %11 = vector.shape_cast %10 : vector<16x128xf32> to vector<2x8x128xf32>
    %cst_5 = arith.constant dense<0.000000e+00> : vector<8x128xf32>
    %12 = vector.multi_reduction <add>, %11, %cst_5 [0] : vector<2x8x128xf32> to vector<8x128xf32>
    %13 = arith.addf %3, %12 : vector<8x128xf32>
    %c0_6 = arith.constant 0 : index
    %c0_7 = arith.constant 0 : index
    %c0_8 = arith.constant 0 : index
    %14 = vector.load %arg4[%c0_6, %c0_7, %c0_8] : memref<1x8x128xf32, #tpu.memory_space<vmem>>, vector<1x8x128xf32>
    %15 = vector.shape_cast %9 : vector<8x128xf32> to vector<1x8x128xf32>
    %16 = arith.addf %14, %15 : vector<1x8x128xf32>
    %c0_9 = arith.constant 0 : index
    %c0_10 = arith.constant 0 : index
    %c0_11 = arith.constant 0 : index
    %17 = vector.load %arg4[%c0_9, %c0_10, %c0_11] : memref<1x8x128xf32, #tpu.memory_space<vmem>>, vector<1x8x128xf32>
    tpu.vector_store %arg4[%c0_9, %c0_10, %c0_11], %16 {strides = array<i32>} : memref<1x8x128xf32, #tpu.memory_space<vmem>>, vector<1x8x128xf32>,
    %c0_12 = arith.constant 0 : index
    %c0_13 = arith.constant 0 : index
    %c0_14 = arith.constant 0 : index
    %18 = vector.load %arg5[%c0_12, %c0_13, %c0_14] : memref<1x8x128xf32, #tpu.memory_space<vmem>>, vector<1x8x128xf32>
    %19 = vector.shape_cast %13 : vector<8x128xf32> to vector<1x8x128xf32>
    %20 = arith.addf %18, %19 : vector<1x8x128xf32>
    %c0_15 = arith.constant 0 : index
    %c0_16 = arith.constant 0 : index
    %c0_17 = arith.constant 0 : index
    %21 = vector.load %arg5[%c0_15, %c0_16, %c0_17] : memref<1x8x128xf32, #tpu.memory_space<vmem>>, vector<1x8x128xf32>
    tpu.vector_store %arg5[%c0_15, %c0_16, %c0_17], %20 {strides = array<i32>} : memref<1x8x128xf32, #tpu.memory_space<vmem>>, vector<1x8x128xf32>,
    return
  }
  func.func @transform_0(%arg0: i32, %arg1: i32) -> (i32, i32) {
    %c1_i32 = arith.constant 1 : i32
    %0 = arith.muli %arg0, %c1_i32 : i32
    %1 = arith.addi %0, %arg1 : i32
    %c0_i32 = arith.constant 0 : i32
    %2 = arith.minsi %1, %c0_i32 : i32
    %c0_i32_0 = arith.constant 0 : i32
    %c0_i32_1 = arith.constant 0 : i32
    return %2, %c0_i32_0 : i32, i32
  }
  func.func @transform_1(%arg0: i32, %arg1: i32) -> (i32, i32) {
    %c1_i32 = arith.constant 1 : i32
    %0 = arith.muli %arg0, %c1_i32 : i32
    %1 = arith.addi %0, %arg1 : i32
    %c0_i32 = arith.constant 0 : i32
    %2 = arith.minsi %1, %c0_i32 : i32
    %c0_i32_0 = arith.constant 0 : i32
    %c0_i32_1 = arith.constant 0 : i32
    return %2, %c0_i32_0 : i32, i32
  }
  func.func @transform_2(%arg0: i32, %arg1: i32) -> (i32, i32, i32) {
    %c0_i32 = arith.constant 0 : i32
    %c0_i32_0 = arith.constant 0 : i32
    %c0_i32_1 = arith.constant 0 : i32
    return %arg0, %c0_i32, %c0_i32_0 : i32, i32, i32
  }
  func.func @transform_3(%arg0: i32, %arg1: i32) -> (i32, i32, i32) {
    %c0_i32 = arith.constant 0 : i32
    %c0_i32_0 = arith.constant 0 : i32
    %c0_i32_1 = arith.constant 0 : i32
    return %arg0, %c0_i32, %c0_i32_0 : i32, i32, i32
  }
}

</mosaic_0001>

<llo_original>
// kernel: tpu_custom_call.1
$region0: #{tpu_custom_call.1}
  #allocation0 [shape = 'u32[]', space=smem, size = 0x4, offset = 0x4, fixed_abs, tag = 'smem constant byte address 0x4 - core index']
  #allocation1 [shape = 'u32[72,128]{1,0:T(1,128)}', space=vmem, size = 0x9000, scoped, tag = 'internal scratch']
  %s0 = inlined_call_operand.hbm [shape: f32[16,128], index: 0, kind: input, shape index: {}]
  %s1 = inlined_call_operand.hbm [shape: f32[16,128], index: 1, kind: input, shape index: {}]
  %s2 = inlined_call_operand.hbm [shape: f32[1,8,128], index: 2, kind: output, shape index: {0}]
  %s3 = inlined_call_operand.hbm [shape: f32[1,8,128], index: 3, kind: output, shape index: {1}]
  %4 = xla_tuple %s2, %s3
  %s5 = sld [smem:[#allocation0]]
  $region38: #{tpu_custom_call.1} parent=0
    _
  %s7 = ssub.s32 1, %s5
  %s8 = scalar_select 0, %s7, %s5
  $region1: #{tpu_custom_call.1} parent=0
    #allocation2 [shape = 'u8[8192]{0}', space=vmem, size = 0x2000, scoped, tag = 'input window, operand 0, single buffered']
    #allocation3 [shape = 's32[1]{0}', space=sflag, size = 0x4, scoped, tag = 'scoped memory for tpu_custom_call.1']
    #allocation4 [shape = 's32[1]{0}', space=sflag, size = 0x4, scoped, tag = 'scoped memory for tpu_custom_call.1']
    #allocation5 [shape = 'u8[8192]{0}', space=vmem, size = 0x2000, scoped, tag = 'input window, operand 1, single buffered']
    #allocation6 [shape = 's32[1]{0}', space=sflag, size = 0x4, scoped, tag = 'scoped memory for tpu_custom_call.1']
    #allocation7 [shape = 'u8[4096]{0}', space=vmem, size = 0x1000, scoped, tag = 'output window, operand 0, single buffered']
    #allocation8 [shape = 'u8[4096]{0}', space=vmem, size = 0x1000, scoped, tag = 'output window, operand 1, single buffered']
    #allocation9 [shape = 's32[1]{0}', space=sflag, size = 0x4, scoped, tag = 'scoped memory for tpu_custom_call.1']
    %9 = vsyncpa [#allocation3], 0
    %10 = vsyncpa [#allocation6], 0
    %11 = vsyncpa [#allocation4], 0
    %12 = vsyncpa [#allocation9], 0
    // Predicated region
    $region2: #{tpu_custom_call.1} parent=1 // pred_check
      _
    $region3: #{tpu_custom_call.1} parent=1 // pred_check_branch
      %14 = sbr.rel (0) target = $region5
    $region4: #{tpu_custom_call.1} parent=1 // pred_region
      %s15 = sadd.s32 0, 0
      %p16 = scmp.lt.s32.totalorder %s15, 0
      %s17 = scalar_select %p16, %s15, 0
      %s18 = smul.u32 2, %s17
      %20 = vsyncadd [#allocation3], 0
      %s21 = smul.addr %s18, 8
      %s22 = scalar_lea.hbm %s0, %s21
      %s23 = sshll.u32 %s22, 4
      %s24 = int_to_ptr.hbm [resolvable:$true] %s23
      %s25 = sshll.u32 [#allocation2], 4
      %s26 = int_to_ptr.vmem [resolvable:$true] %s25
      %31 = dma.hbm_to_vmem [thread:$0]  %s24, 256, %s26, [#allocation3], 128, 128, 8
    $region5: #{tpu_custom_call.1} parent=1 // pred_fallthru
      _
    // Predicated region
    $region6: #{tpu_custom_call.1} parent=1 // pred_check
      _
    $region7: #{tpu_custom_call.1} parent=1 // pred_check_branch
      %33 = sbr.rel (0) target = $region9
    $region8: #{tpu_custom_call.1} parent=1 // pred_region
      %s34 = sadd.s32 0, 0
      %p35 = scmp.lt.s32.totalorder %s34, 0
      %s36 = scalar_select %p35, %s34, 0
      %s37 = smul.u32 2, %s36
      %39 = vsyncadd [#allocation6], 0
      %s40 = smul.addr %s37, 8
      %s41 = scalar_lea.hbm %s1, %s40
      %s42 = sshll.u32 %s41, 4
      %s43 = int_to_ptr.hbm [resolvable:$true] %s42
      %s44 = sshll.u32 [#allocation5], 4
      %s45 = int_to_ptr.vmem [resolvable:$true] %s44
      %50 = dma.hbm_to_vmem [thread:$0]  %s43, 256, %s45, [#allocation6], 128, 128, 8
    $region9: #{tpu_custom_call.1} parent=1 // pred_fallthru
      _
    // Predicated region
    $region10: #{tpu_custom_call.1} parent=1 // pred_check
      _
    $region11: #{tpu_custom_call.1} parent=1 // pred_check_branch
      %52 = sbr.rel (0) target = $region13
    $region12: #{tpu_custom_call.1} parent=1 // pred_region
      %54 = dma.done [#allocation3], 256
    $region13: #{tpu_custom_call.1} parent=1 // pred_fallthru
      _
    // Predicated region
    $region14: #{tpu_custom_call.1} parent=1 // pred_check
      _
    $region15: #{tpu_custom_call.1} parent=1 // pred_check_branch
      %56 = sbr.rel (0) target = $region17
    $region16: #{tpu_custom_call.1} parent=1 // pred_region
      %58 = dma.done [#allocation6], 256
    $region17: #{tpu_custom_call.1} parent=1 // pred_fallthru
      _
    %s59 = sadd.s32 0, 0
    %p60 = scmp.lt.s32.totalorder %s59, 0
    %s61 = scalar_select %p60, %s59, 0
    %s62 = smul.u32 2, %s61
    %s63 = sadd.s32 0, 0
    %p64 = scmp.lt.s32.totalorder %s63, 0
    %s65 = scalar_select %p64, %s63, 0
    %s66 = smul.u32 2, %s65
    %p67 = scmp.eq.s32.totalorder 0, 0
    // Predicated region
    $region18: #{tpu_custom_call.1} parent=1 // pred_check
      %p68 = pneg %p67
    $region19: #{tpu_custom_call.1} parent=1 // pred_check_branch
      %70 = sbr.rel (%p68) target = $region21
    $region20: #{tpu_custom_call.1} parent=1 // pred_region
      %71 = vst [vmem:[#allocation7] sm:$0xff] 0.0
      %72 = vst [vmem:[#allocation8] sm:$0xff] 0.0
    $region21: #{tpu_custom_call.1} parent=1 // pred_fallthru
      _
    %v73 = vld [vmem:[#allocation2] sm:$0xff]
    %v74 = vld [vmem:[#allocation2 + $0x8] sm:$0xff]
    %v75 = vld [vmem:[#allocation5] sm:$0xff]
    %v76 = vld [vmem:[#allocation5 + $0x8] sm:$0xff]
    %v77 = vmul.f32 %v73, %v75
    %v78 = vmul.f32 %v74, %v76
    %v79 = vadd.f32 %v77, %v78
    %v80 = vadd.f32 %v79, 0.0
    %v81 = vadd.f32 %v73, %v75
    %v82 = vadd.f32 %v74, %v76
    %v83 = vadd.f32 %v81, %v82
    %v84 = vadd.f32 %v83, 0.0
    %v85 = vld [vmem:[#allocation7] sm:$0xff]
    %v86 = vadd.f32 %v85, %v80
    %87 = vst [vmem:[#allocation7] sm:$0xff] %v86
    %v88 = vld [vmem:[#allocation8] sm:$0xff]
    %v89 = vadd.f32 %v88, %v84
    %90 = vst [vmem:[#allocation8] sm:$0xff] %v89
    // Predicated region
    $region22: #{tpu_custom_call.1} parent=1 // pred_check
      _
    $region23: #{tpu_custom_call.1} parent=1 // pred_check_branch
      %92 = sbr.rel (0) target = $region25
    $region24: #{tpu_custom_call.1} parent=1 // pred_region
      %94 = vsyncadd [#allocation4], 0
      %s96 = sshll.u32 [#allocation7], 4
      %s97 = int_to_ptr.vmem [resolvable:$true] %s96
      %s98 = sshll.u32 %s2, 4
      %s99 = int_to_ptr.hbm [resolvable:$true] %s98
      %101 = dma.vmem_to_hbm [thread:$0]  %s97, 128, %s99, [#allocation4]
    $region25: #{tpu_custom_call.1} parent=1 // pred_fallthru
      _
    // Predicated region
    $region26: #{tpu_custom_call.1} parent=1 // pred_check
      _
    $region27: #{tpu_custom_call.1} parent=1 // pred_check_branch
      %103 = sbr.rel (0) target = $region29
    $region28: #{tpu_custom_call.1} parent=1 // pred_region
      %105 = vsyncadd [#allocation9], 0
      %s107 = sshll.u32 [#allocation8], 4
      %s108 = int_to_ptr.vmem [resolvable:$true] %s107
      %s109 = sshll.u32 %s3, 4
      %s110 = int_to_ptr.hbm [resolvable:$true] %s109
      %112 = dma.vmem_to_hbm [thread:$0]  %s108, 128, %s110, [#allocation9]
    $region29: #{tpu_custom_call.1} parent=1 // pred_fallthru
      _
    // Predicated region
    $region30: #{tpu_custom_call.1} parent=1 // pred_check
      _
    $region31: #{tpu_custom_call.1} parent=1 // pred_check_branch
      %114 = sbr.rel (0) target = $region33
    $region32: #{tpu_custom_call.1} parent=1 // pred_region
      %116 = dma.done [#allocation4], 128
    $region33: #{tpu_custom_call.1} parent=1 // pred_fallthru
      _
    // Predicated region
    $region34: #{tpu_custom_call.1} parent=1 // pred_check
      _
    $region35: #{tpu_custom_call.1} parent=1 // pred_check_branch
      %118 = sbr.rel (0) target = $region37
    $region36: #{tpu_custom_call.1} parent=1 // pred_region
      %120 = dma.done [#allocation9], 128
    $region37: #{tpu_custom_call.1} parent=1 // pred_fallthru
      _
    %121 = vsyncpa [#allocation3], 1
    %122 = vsyncpa [#allocation6], 1
    %123 = vsyncpa [#allocation4], 1
    %124 = vsyncpa [#allocation9], 1

</llo_original>
